<compile_context>
chip_gen: v5e
topology: v5e:2x2
jax: 0.10.0
libtpu: 0.0.40
codegen_flags: <defaults>
</compile_context>

<pallas_src>
import jax
import jax.numpy as jnp
from jax.experimental import pallas as pl
from jax.experimental.pallas import tpu as pltpu

# ---------------- config (small shapes consistent with the module) ----------------
B, N = 2, 32                 # batch, number of input points
NPOINT, RADIUS, NSAMPLE = 8, 0.4, 8
D_FEAT = 3                   # extra per-point feature channels
IN_CH = 3 + D_FEAT           # Conv input channels (grouped xyz_norm ++ features) = 6
MLP = (16, 32)               # mlp channel list
H1, H2 = MLP
BN_EPS = 1e-5

# padded dims for TPU tiling / lane-dense operands
IN_CH_PAD = 8                # K of the first matmul, sublane-aligned; col IN_CH = bias lane
BIAS_LANE = IN_CH            # column of x that carries 1.0 (conv1 bias folded into w1)
H1_PAD = 128                 # lane-dense intermediate / weight width
H2_PAD = 128                 # lane-dense output width
GROUPS = B * NPOINT          # 16 output rows (b-major, s-minor)
ROWS = NSAMPLE * GROUPS      # 128 grouped points, ns-major row ordering
assert ROWS == NSAMPLE * B * NPOINT  # kernel max hard-codes ns-major contiguous blocks

# ---------------- plain-JAX grouping glue (data-dependent gather / sort) -----------
def square_distance(src, dst):
    d = -2.0 * jnp.einsum("bnc,bmc->bnm", src, dst)
    d += jnp.sum(src ** 2, -1)[:, :, None]
    d += jnp.sum(dst ** 2, -1)[:, None, :]
    return d

def index_points(points, idx):
    # points: [B, N, C], idx: [B, ...] -> [B, ..., C]
    return jax.vmap(lambda p, i: p[i])(points, idx)

def farthest_point_sample(xyz, npoint, key):
    b, n, _ = xyz.shape
    distance = jnp.full((b, n), 1e10, dtype=xyz.dtype)
    farthest = jax.random.randint(key, (b,), 0, n)
    batch_idx = jnp.arange(b)
    cents = []
    for _ in range(npoint):
        cents.append(farthest)
        centroid = xyz[batch_idx, farthest, :][:, None, :]
        dist = jnp.sum((xyz - centroid) ** 2, -1)
        distance = jnp.minimum(distance, dist)
        farthest = jnp.argmax(distance, -1)
    return jnp.stack(cents, axis=1)

def query_ball_point(radius, nsample, xyz, new_xyz):
    b, n, _ = xyz.shape
    s = new_xyz.shape[1]
    sqr = square_distance(new_xyz, xyz)                       # [B, S, N]
    gi = jnp.broadcast_to(jnp.arange(n), (b, s, n))
    gi = jnp.where(sqr > radius ** 2, n, gi)
    gi = jnp.sort(gi, axis=-1)[:, :, :nsample]
    first = gi[:, :, :1]
    gi = jnp.where(gi == n, first, gi)
    return gi

def sample_and_group(npoint, radius, nsample, xyz, points, key):
    fps_idx = farthest_point_sample(xyz, npoint, key)          # [B, S]
    new_xyz = index_points(xyz, fps_idx)                       # [B, S, 3]
    idx = query_ball_point(radius, nsample, xyz, new_xyz)      # [B, S, ns]
    grouped_xyz = index_points(xyz, idx)                       # [B, S, ns, 3]
    grouped_xyz_norm = grouped_xyz - new_xyz[:, :, None, :]
    grouped_points = index_points(points, idx)                 # [B, S, ns, D]
    new_points = jnp.concatenate([grouped_xyz_norm, grouped_points], axis=-1)
    return new_xyz, new_points                                 # [B,S,3], [B,S,ns,3+D]

# ---------------- Pallas kernel: folded-BN MLP + ReLU + max over nsample ------------
def sa_mlp_kernel(x_ref, w1_ref, w2_ref, c2_ref, o_ref):
    # x_ref: (ROWS, IN_CH_PAD) bf16, rows ns-major then (b, s); col BIAS_LANE == 1.0.
    # w1_ref: (IN_CH_PAD, H1_PAD) bf16, BN1-folded weight; row BIAS_LANE = folded bias.
    # w2_ref: (H1_PAD, H2_PAD) bf16, BN2-folded weight.  c2_ref: (1, H2_PAD) f32.
    h = jnp.dot(x_ref[...], w1_ref[...], preferred_element_type=jnp.float32)
    h = jnp.maximum(h, 0.0)                                     # conv1 + BN1(eval) + ReLU
    h = jnp.dot(h.astype(jnp.bfloat16), w2_ref[...],
                preferred_element_type=jnp.float32)
    h = jnp.maximum(h + c2_ref[...], 0.0)                       # conv2 + BN2(eval) + ReLU
    # max over the nsample neighborhood: ns-major layout -> NSAMPLE contiguous
    # GROUPS-row blocks, pairwise tree reduction (depth log2(ns)), all f32.
    blocks = [h[k * GROUPS:(k + 1) * GROUPS, :] for k in range(NSAMPLE)]
    while len(blocks) > 1:
        nxt = [jnp.maximum(blocks[i], blocks[i + 1])
               for i in range(0, len(blocks) - 1, 2)]
        if len(blocks) % 2:
            nxt.append(blocks[-1])
        blocks = nxt
    o_ref[...] = blocks[0]                                      # (GROUPS, H2_PAD), lane-dense

def pointnet_sa_mlp(x_flat, w1, w2, c2):
    vmem = pl.BlockSpec(memory_space=pltpu.MemorySpace.VMEM)    # untiled, VMEM-resident
    return pl.pallas_call(
        sa_mlp_kernel,
        out_shape=jax.ShapeDtypeStruct((GROUPS, H2_PAD), jnp.float32),
        in_specs=[vmem, vmem, vmem, vmem],
        out_specs=vmem,
    )(x_flat, w1, w2, c2)

# ---------------- full module forward ----------------------------------------------
def pointnet_set_abstraction(xyz_bcn, points_bdn, params, key):
    """xyz: [B,3,N], points: [B,D,N]  ->  new_xyz: [B,3,S], new_points: [B,C_out,S]"""
    xyz = jnp.transpose(xyz_bcn, (0, 2, 1))
    points = jnp.transpose(points_bdn, (0, 2, 1))
    new_xyz, new_points = sample_and_group(NPOINT, RADIUS, NSAMPLE, xyz, points, key)
    # [B,S,ns,C] -> ns-major flat rows [ns*B*S, C]; pad channels 6 -> 8 with a bias lane.
    x = jnp.transpose(new_points, (2, 0, 1, 3)).reshape(ROWS, IN_CH)
    x = jnp.pad(x, ((0, 0), (0, IN_CH_PAD - IN_CH)))
    x = x.at[:, BIAS_LANE].set(1.0)                             # bias lane for folded conv1 bias
    x = x.astype(jnp.bfloat16)                                  # bf16 matmul operand, f32 acc
    out = pointnet_sa_mlp(x, *params)                           # (B*NPOINT, H2_PAD) f32
    feat = out[:, :H2].reshape(B, NPOINT, H2)                   # drop channel padding
    return jnp.transpose(new_xyz, (0, 2, 1)), jnp.transpose(feat, (0, 2, 1))

# ---------------- deterministic parameters: raw conv/BN, then fold + pad -------------
def make_raw_params(key):
    ks = jax.random.split(key, 4)
    w1 = 0.2 * jax.random.normal(ks[0], (IN_CH, H1), jnp.float32)   # Conv2d(IN_CH,H1,1)
    b1 = 0.01 * jnp.arange(H1, dtype=jnp.float32)[None, :]
    w2 = 0.2 * jax.random.normal(ks[1], (H1, H2), jnp.float32)      # Conv2d(H1,H2,1)
    b2 = 0.01 * jnp.arange(H2, dtype=jnp.float32)[None, :]
    def bn(c, k):                                                   # BatchNorm2d (eval)
        gamma = 1.0 + 0.1 * jax.random.normal(k, (1, c), jnp.float32)
        beta = 0.05 * jnp.arange(c, dtype=jnp.float32)[None, :]
        mean = 0.02 * jnp.arange(c, dtype=jnp.float32)[None, :]
        var = 1.0 + 0.01 * jnp.arange(c, dtype=jnp.float32)[None, :]
        return gamma, beta, mean, var
    return (w1, b1, *bn(H1, ks[2]), w2, b2, *bn(H2, ks[3]))

def fold_and_pad_params(raw):
    (w1, b1, g1, be1, m1, v1, w2, b2, g2, be2, m2, v2) = raw
    s1 = g1 / jnp.sqrt(v1 + BN_EPS); sh1 = be1 - m1 * s1
    s2 = g2 / jnp.sqrt(v2 + BN_EPS); sh2 = be2 - m2 * s2
    w1f = w1 * s1                     # (IN_CH, H1): (x@w + b)*s + sh == x@(w*s) + (b*s+sh)
    c1 = b1 * s1 + sh1                # (1, H1)  -> folded into bias lane of w1
    w2f = w2 * s2                     # (H1, H2)
    c2 = b2 * s2 + sh2                # (1, H2)
    # w1p: rows 0..IN_CH-1 = folded weight, row BIAS_LANE = folded bias, rest zero;
    # columns H1..H1_PAD-1 are zero (dead lanes: relu(0)=0, inert through w2p's zero rows).
    w1p = jnp.zeros((IN_CH_PAD, H1_PAD), jnp.float32)
    w1p = w1p.at[:IN_CH, :H1].set(w1f)
    w1p = w1p.at[BIAS_LANE, :H1].set(c1[0])
    # w2p: zero rows above H1 and zero columns above H2 are inert; sliced off in wrapper.
    w2p = jnp.zeros((H1_PAD, H2_PAD), jnp.float32)
    w2p = w2p.at[:H1, :H2].set(w2f)
    c2p = jnp.pad(c2, ((0, 0), (0, H2_PAD - H2)))
    return (w1p.astype(jnp.bfloat16), w2p.astype(jnp.bfloat16), c2p.astype(jnp.float32))

# ---------------- main ----------------------------------------------------------------
if __name__ == "__main__":
    root = jax.random.PRNGKey(0)
    k_xyz, k_pts, k_par, k_fps = jax.random.split(root, 4)
    xyz = jax.random.uniform(k_xyz, (B, 3, N), jnp.float32)          # [B, 3, N]
    points = jax.random.normal(k_pts, (B, D_FEAT, N), jnp.float32)   # [B, D, N]
    params = fold_and_pad_params(make_raw_params(k_par))

    new_xyz, new_points = pointnet_set_abstraction(xyz, points, params, k_fps)
    jax.block_until_ready((new_xyz, new_points))

    assert new_xyz.shape == (B, 3, NPOINT)
    assert new_points.shape == (B, H2, NPOINT)
    assert bool(jnp.all(jnp.isfinite(new_points)))
    print("KERNEL_OK")
</pallas_src>

<mosaic_0001>
module attributes {stable_mosaic.version = 11 : i64} {
  func.func @sa_mlp_kernel(%arg0: memref<128x8xbf16, #tpu.memory_space<vmem>>, %arg1: memref<8x128xbf16, #tpu.memory_space<vmem>>, %arg2: memref<128x128xbf16, #tpu.memory_space<vmem>>, %arg3: memref<1x128xf32, #tpu.memory_space<vmem>>, %arg4: memref<16x128xf32, #tpu.memory_space<vmem>>) attributes {dimension_semantics = [], scalar_prefetch = 0 : i64, scratch_operands = 0 : i64, tpu.core_type = #tpu.core_type<tc>} {
    %c0 = arith.constant 0 : index
    %c0_0 = arith.constant 0 : index
    %0 = vector.load %arg0[%c0, %c0_0] : memref<128x8xbf16, #tpu.memory_space<vmem>>, vector<128x8xbf16>
    %c0_1 = arith.constant 0 : index
    %c0_2 = arith.constant 0 : index
    %1 = vector.load %arg1[%c0_1, %c0_2] : memref<8x128xbf16, #tpu.memory_space<vmem>>, vector<8x128xbf16>
    %cst = arith.constant dense<0.000000e+00> : vector<128x128xf32>
    %2 = tpu.matmul %0, %1, %cst {dimension_numbers = #tpu.dot_dimension_numbers<[1], [0], [0], [1], [0, 0, 1, 1], [], []>} : vector<128x8xbf16>, vector<8x128xbf16>, vector<128x128xf32> -> vector<128x128xf32>
    %cst_3 = arith.constant 0.000000e+00 : f32
    %3 = vector.broadcast %cst_3 : f32 to vector<128x128xf32>
    %4 = arith.maximumf %2, %3 : vector<128x128xf32>
    %5 = arith.truncf %4 : vector<128x128xf32> to vector<128x128xbf16>
    %c0_4 = arith.constant 0 : index
    %c0_5 = arith.constant 0 : index
    %6 = vector.load %arg2[%c0_4, %c0_5] : memref<128x128xbf16, #tpu.memory_space<vmem>>, vector<128x128xbf16>
    %cst_6 = arith.constant dense<0.000000e+00> : vector<128x128xf32>
    %7 = tpu.matmul %5, %6, %cst_6 {dimension_numbers = #tpu.dot_dimension_numbers<[1], [0], [0], [1], [0, 0, 1, 1], [], []>} : vector<128x128xbf16>, vector<128x128xbf16>, vector<128x128xf32> -> vector<128x128xf32>
    %c0_7 = arith.constant 0 : index
    %c0_8 = arith.constant 0 : index
    %8 = vector.load %arg3[%c0_7, %c0_8] : memref<1x128xf32, #tpu.memory_space<vmem>>, vector<1x128xf32>
    %9 = vector.broadcast %8 : vector<1x128xf32> to vector<128x128xf32>
    %10 = arith.addf %7, %9 : vector<128x128xf32>
    %cst_9 = arith.constant 0.000000e+00 : f32
    %11 = vector.broadcast %cst_9 : f32 to vector<128x128xf32>
    %12 = arith.maximumf %10, %11 : vector<128x128xf32>
    %13 = vector.extract_strided_slice %12 {offsets = [0, 0], sizes = [16, 128], strides = [1, 1]} : vector<128x128xf32> to vector<16x128xf32>
    %14 = vector.extract_strided_slice %12 {offsets = [16, 0], sizes = [16, 128], strides = [1, 1]} : vector<128x128xf32> to vector<16x128xf32>
    %15 = vector.extract_strided_slice %12 {offsets = [32, 0], sizes = [16, 128], strides = [1, 1]} : vector<128x128xf32> to vector<16x128xf32>
    %16 = vector.extract_strided_slice %12 {offsets = [48, 0], sizes = [16, 128], strides = [1, 1]} : vector<128x128xf32> to vector<16x128xf32>
    %17 = vector.extract_strided_slice %12 {offsets = [64, 0], sizes = [16, 128], strides = [1, 1]} : vector<128x128xf32> to vector<16x128xf32>
    %18 = vector.extract_strided_slice %12 {offsets = [80, 0], sizes = [16, 128], strides = [1, 1]} : vector<128x128xf32> to vector<16x128xf32>
    %19 = vector.extract_strided_slice %12 {offsets = [96, 0], sizes = [16, 128], strides = [1, 1]} : vector<128x128xf32> to vector<16x128xf32>
    %20 = vector.extract_strided_slice %12 {offsets = [112, 0], sizes = [16, 128], strides = [1, 1]} : vector<128x128xf32> to vector<16x128xf32>
    %21 = arith.maximumf %13, %14 : vector<16x128xf32>
    %22 = arith.maximumf %15, %16 : vector<16x128xf32>
    %23 = arith.maximumf %17, %18 : vector<16x128xf32>
    %24 = arith.maximumf %19, %20 : vector<16x128xf32>
    %25 = arith.maximumf %21, %22 : vector<16x128xf32>
    %26 = arith.maximumf %23, %24 : vector<16x128xf32>
    %27 = arith.maximumf %25, %26 : vector<16x128xf32>
    %c0_10 = arith.constant 0 : index
    %c0_11 = arith.constant 0 : index
    %28 = vector.load %arg4[%c0_10, %c0_11] : memref<16x128xf32, #tpu.memory_space<vmem>>, vector<16x128xf32>
    tpu.vector_store %arg4[%c0_10, %c0_11], %27 {strides = array<i32>} : memref<16x128xf32, #tpu.memory_space<vmem>>, vector<16x128xf32>,
    return
  }
}

</mosaic_0001>

<llo_original>
// kernel: tpu_custom_call.1
$region0: #{tpu_custom_call.1}
  #allocation0 [shape = 'u32[]', space=smem, size = 0x4, offset = 0x4, fixed_abs, tag = 'smem constant byte address 0x4 - core index']
  #allocation1 [shape = 'u32[72,128]{1,0:T(1,128)}', space=vmem, size = 0x9000, scoped, tag = 'internal scratch']
  %s0 = inlined_call_operand.vmem [shape: bf16[128,8], index: 0, kind: input, shape index: {}]
  %s1 = inlined_call_operand.vmem [shape: bf16[8,128], index: 1, kind: input, shape index: {}]
  %s2 = inlined_call_operand.vmem [shape: bf16[128,128], index: 2, kind: input, shape index: {}]
  %s3 = inlined_call_operand.vmem [shape: f32[1,128], index: 3, kind: input, shape index: {}]
  %s4 = inlined_call_operand.hbm [shape: f32[16,128], index: 4, kind: output, shape index: {}]
  %s5 = sld [smem:[#allocation0]]
  $region26: #{tpu_custom_call.1} parent=0
    _
  %s7 = ssub.s32 1, %s5
  %s8 = scalar_select 0, %s7, %s5
  $region1: #{tpu_custom_call.1} parent=0
    #allocation2 [shape = 'u8[8192]{0}', space=vmem, size = 0x2000, scoped, tag = 'output window, operand 0, single buffered']
    #allocation3 [shape = 's32[1]{0}', space=sflag, size = 0x4, scoped, tag = 'scoped memory for tpu_custom_call.1']
    %9 = vsyncpa [#allocation3], 0
    // Predicated region
    $region2: #{tpu_custom_call.1} parent=1 // pred_check
      _
    $region3: #{tpu_custom_call.1} parent=1 // pred_check_branch
      %11 = sbr.rel (0) target = $region5
    $region4: #{tpu_custom_call.1} parent=1 // pred_region
      _
    $region5: #{tpu_custom_call.1} parent=1 // pred_fallthru
      _
    // Predicated region
    $region6: #{tpu_custom_call.1} parent=1 // pred_check
      _
    $region7: #{tpu_custom_call.1} parent=1 // pred_check_branch
      %13 = sbr.rel (0) target = $region9
    $region8: #{tpu_custom_call.1} parent=1 // pred_region
      _
    $region9: #{tpu_custom_call.1} parent=1 // pred_fallthru
      _
    // Predicated region
    $region10: #{tpu_custom_call.1} parent=1 // pred_check
      _
    $region11: #{tpu_custom_call.1} parent=1 // pred_check_branch
      %15 = sbr.rel (0) target = $region13
    $region12: #{tpu_custom_call.1} parent=1 // pred_region
      _
    $region13: #{tpu_custom_call.1} parent=1 // pred_fallthru
      _
    // Predicated region
    $region14: #{tpu_custom_call.1} parent=1 // pred_check
      _
    $region15: #{tpu_custom_call.1} parent=1 // pred_check_branch
      %17 = sbr.rel (0) target = $region17
    $region16: #{tpu_custom_call.1} parent=1 // pred_region
      _
    $region17: #{tpu_custom_call.1} parent=1 // pred_fallthru
      _
    %v19 = vld [vmem:[%s0] sm:$0xf]
    %v20 = vld [vmem:[%s0 + $0x4] sm:$0xf]
    %v21 = vld [vmem:[%s0 + $0x8] sm:$0xf]
    %v22 = vld [vmem:[%s0 + $0xc] sm:$0xf]
    %v23 = vld [vmem:[%s0 + $0x10] sm:$0xf]
    %v24 = vld [vmem:[%s0 + $0x14] sm:$0xf]
    %v25 = vld [vmem:[%s0 + $0x18] sm:$0xf]
    %v26 = vld [vmem:[%s0 + $0x1c] sm:$0xf]
    %v27 = vld [vmem:[%s0 + $0x20] sm:$0xf]
    %v28 = vld [vmem:[%s0 + $0x24] sm:$0xf]
    %v29 = vld [vmem:[%s0 + $0x28] sm:$0xf]
    %v30 = vld [vmem:[%s0 + $0x2c] sm:$0xf]
    %v31 = vld [vmem:[%s0 + $0x30] sm:$0xf]
    %v32 = vld [vmem:[%s0 + $0x34] sm:$0xf]
    %v33 = vld [vmem:[%s0 + $0x38] sm:$0xf]
    %v34 = vld [vmem:[%s0 + $0x3c] sm:$0xf]
    %v35 = vld [vmem:[%s1] sm:$0xf]
    %v52 = vunpack.c.l.b16 %v19
    %v53 = vunpack.c.l.b16 %v20
    %v54 = vunpack.c.l.b16 %v21
    %v55 = vunpack.c.l.b16 %v22
    %v56 = vunpack.c.l.b16 %v23
    %v57 = vunpack.c.l.b16 %v24
    %v58 = vunpack.c.l.b16 %v25
    %v59 = vunpack.c.l.b16 %v26
    %v60 = vunpack.c.l.b16 %v27
    %v61 = vunpack.c.l.b16 %v28
    %v62 = vunpack.c.l.b16 %v29
    %v63 = vunpack.c.l.b16 %v30
    %v64 = vunpack.c.l.b16 %v31
    %v65 = vunpack.c.l.b16 %v32
    %v66 = vunpack.c.l.b16 %v33
    %v67 = vunpack.c.l.b16 %v34
    %v68 = vpack.c.b16 %v53, %v52
    %v69 = vpack.c.b16 %v55, %v54
    %v70 = vpack.c.b16 %v57, %v56
    %v71 = vpack.c.b16 %v59, %v58
    %v72 = vpack.c.b16 %v61, %v60
    %v73 = vpack.c.b16 %v63, %v62
    %v74 = vpack.c.b16 %v65, %v64
    %v75 = vpack.c.b16 %v67, %v66
    %vm76 = vcmask 64512
    %v78 = vsel %vm76, %v68, 0
    %v81 = vsel %vm76, %v69, 0
    %v84 = vsel %vm76, %v70, 0
    %v87 = vsel %vm76, %v71, 0
    %v90 = vsel %vm76, %v72, 0
    %v93 = vsel %vm76, %v73, 0
    %v96 = vsel %vm76, %v74, 0
    %v99 = vsel %vm76, %v75, 0
    %vm101 = vcmask 1043456
    %v103 = vsel %vm101, %v35, 0
    %105 = vmatpush.bf16.msra.mxu0 0
    %106 = vmatpush.bf16.msra.mxu0 0
    %107 = vmatpush.bf16.msra.mxu0 0
    %108 = vmatpush.bf16.msra.mxu0 0
    %109 = vmatpush.bf16.msra.mxu0 0
    %110 = vmatpush.bf16.msra.mxu0 0
    %111 = vmatpush.bf16.msra.mxu0 0
    %112 = vmatpush.bf16.msra.mxu0 %v103
    %113 = vmatmul.bf16.gmra.mxu0 %v78
    %v114 = vpop.f32.mrf.mxu0
    %v115 = vadd.f32 0.0, %v114
    %v116 = vpop.f32.mrf.mxu0
    %v117 = vadd.f32 0.0, %v116
    %118 = vmatmul.bf16.gmra.mxu0 %v81
    %v119 = vpop.f32.mrf.mxu0
    %v120 = vadd.f32 0.0, %v119
    %v121 = vpop.f32.mrf.mxu0
    %v122 = vadd.f32 0.0, %v121
    %123 = vmatmul.bf16.gmra.mxu0 %v84
    %v124 = vpop.f32.mrf.mxu0
    %v125 = vadd.f32 0.0, %v124
    %v126 = vpop.f32.mrf.mxu0
    %v127 = vadd.f32 0.0, %v126
    %128 = vmatmul.bf16.gmra.mxu0 %v87
    %v129 = vpop.f32.mrf.mxu0
    %v130 = vadd.f32 0.0, %v129
    %v131 = vpop.f32.mrf.mxu0
    %v132 = vadd.f32 0.0, %v131
    %133 = vmatmul.bf16.gmra.mxu0 %v90
    %v134 = vpop.f32.mrf.mxu0
    %v135 = vadd.f32 0.0, %v134
    %v136 = vpop.f32.mrf.mxu0
    %v137 = vadd.f32 0.0, %v136
    %138 = vmatmul.bf16.gmra.mxu0 %v93
    %v139 = vpop.f32.mrf.mxu0
    %v140 = vadd.f32 0.0, %v139
    %v141 = vpop.f32.mrf.mxu0
    %v142 = vadd.f32 0.0, %v141
    %143 = vmatmul.bf16.gmra.mxu0 %v96
    %v144 = vpop.f32.mrf.mxu0
    %v145 = vadd.f32 0.0, %v144
    %v146 = vpop.f32.mrf.mxu0
    %v147 = vadd.f32 0.0, %v146
    %148 = vmatmul.bf16.gmra.mxu0 %v99
    %v149 = vpop.f32.mrf.mxu0
    %v150 = vadd.f32 0.0, %v149
    %v151 = vpop.f32.mrf.mxu0
    %v152 = vadd.f32 0.0, %v151
    %153 = vdwg.mxu0
    %v154 = vmax.f32 %v115, 0.0
    %v155 = vmax.f32 %v117, 0.0
    %v156 = vmax.f32 %v120, 0.0
    %v157 = vmax.f32 %v122, 0.0
    %v158 = vmax.f32 %v125, 0.0
    %v159 = vmax.f32 %v127, 0.0
    %v160 = vmax.f32 %v130, 0.0
    %v161 = vmax.f32 %v132, 0.0
    %v162 = vmax.f32 %v135, 0.0
    %v163 = vmax.f32 %v137, 0.0
    %v164 = vmax.f32 %v140, 0.0
    %v165 = vmax.f32 %v142, 0.0
    %v166 = vmax.f32 %v145, 0.0
    %v167 = vmax.f32 %v147, 0.0
    %v168 = vmax.f32 %v150, 0.0
    %v169 = vmax.f32 %v152, 0.0
    %v170 = vpack.c.bf16 %v155, %v154
    %v171 = vpack.c.bf16 %v157, %v156
    %v172 = vpack.c.bf16 %v159, %v158
    %v173 = vpack.c.bf16 %v161, %v160
    %v174 = vpack.c.bf16 %v163, %v162
    %v175 = vpack.c.bf16 %v165, %v164
    %v176 = vpack.c.bf16 %v167, %v166
    %v177 = vpack.c.bf16 %v169, %v168
    %v178 = vld [vmem:[%s2] sm:$0xf]
    %v179 = vld [vmem:[%s2 + $0x4] sm:$0xf]
    %v180 = vld [vmem:[%s2 + $0x8] sm:$0xf]
    %v181 = vld [vmem:[%s2 + $0xc] sm:$0xf]
    %v182 = vld [vmem:[%s2 + $0x10] sm:$0xf]
    %v183 = vld [vmem:[%s2 + $0x14] sm:$0xf]
    %v184 = vld [vmem:[%s2 + $0x18] sm:$0xf]
    %v185 = vld [vmem:[%s2 + $0x1c] sm:$0xf]
    %v186 = vld [vmem:[%s2 + $0x20] sm:$0xf]
    %v187 = vld [vmem:[%s2 + $0x24] sm:$0xf]
    %v188 = vld [vmem:[%s2 + $0x28] sm:$0xf]
    %v189 = vld [vmem:[%s2 + $0x2c] sm:$0xf]
    %v190 = vld [vmem:[%s2 + $0x30] sm:$0xf]
    %v191 = vld [vmem:[%s2 + $0x34] sm:$0xf]
    %v192 = vld [vmem:[%s2 + $0x38] sm:$0xf]
    %v193 = vld [vmem:[%s2 + $0x3c] sm:$0xf]
    %v194 = vld [vmem:[%s3] sm:$0x1]
    %v196 = vperm.slane %v194, 0
    %v214 = vunpack.c.l.b16 %v178
    %v215 = vunpack.c.l.b16 %v179
    %v216 = vunpack.c.l.b16 %v180
    %v217 = vunpack.c.l.b16 %v181
    %v218 = vunpack.c.l.b16 %v182
    %v219 = vunpack.c.l.b16 %v183
    %v220 = vunpack.c.l.b16 %v184
    %v221 = vunpack.c.l.b16 %v185
    %v222 = vunpack.c.l.b16 %v186
    %v223 = vunpack.c.l.b16 %v187
    %v224 = vunpack.c.l.b16 %v188
    %v225 = vunpack.c.l.b16 %v189
    %v226 = vunpack.c.l.b16 %v190
    %v227 = vunpack.c.l.b16 %v191
    %v228 = vunpack.c.l.b16 %v192
    %v229 = vunpack.c.l.b16 %v193
    %v230 = vpack.c.b16 %v215, %v214
    %v231 = vpack.c.b16 %v217, %v216
    %v232 = vpack.c.b16 %v219, %v218
    %v233 = vpack.c.b16 %v221, %v220
    %v234 = vpack.c.b16 %v223, %v222
    %v235 = vpack.c.b16 %v225, %v224
    %v236 = vpack.c.b16 %v227, %v226
    %v237 = vpack.c.b16 %v229, %v228
    %246 = vmatpush.bf16.msra.mxu0 %v237
    %247 = vmatpush.bf16.msra.mxu0 %v236
    %248 = vmatpush.bf16.msra.mxu0 %v235
    %249 = vmatpush.bf16.msra.mxu0 %v234
    %250 = vmatpush.bf16.msra.mxu0 %v233
    %251 = vmatpush.bf16.msra.mxu0 %v232
    %252 = vmatpush.bf16.msra.mxu0 %v231
    %253 = vmatpush.bf16.msra.mxu0 %v230
    %254 = vmatmul.bf16.gmra.mxu0 %v170
    %v255 = vpop.f32.mrf.mxu0
    %v256 = vadd.f32 %v196, %v255
    %v257 = vpop.f32.mrf.mxu0
    %v258 = vadd.f32 %v196, %v257
    %259 = vmatmul.bf16.gmra.mxu0 %v171
    %v260 = vpop.f32.mrf.mxu0
    %v261 = vadd.f32 %v196, %v260
    %v262 = vpop.f32.mrf.mxu0
    %v263 = vadd.f32 %v196, %v262
    %264 = vmatmul.bf16.gmra.mxu0 %v172
    %v265 = vpop.f32.mrf.mxu0
    %v266 = vadd.f32 %v196, %v265
    %v267 = vpop.f32.mrf.mxu0
    %v268 = vadd.f32 %v196, %v267
    %269 = vmatmul.bf16.gmra.mxu0 %v173
    %v270 = vpop.f32.mrf.mxu0
    %v271 = vadd.f32 %v196, %v270
    %v272 = vpop.f32.mrf.mxu0
    %v273 = vadd.f32 %v196, %v272
    %274 = vmatmul.bf16.gmra.mxu0 %v174
    %v275 = vpop.f32.mrf.mxu0
    %v276 = vadd.f32 %v196, %v275
    %v277 = vpop.f32.mrf.mxu0
    %v278 = vadd.f32 %v196, %v277
    %279 = vmatmul.bf16.gmra.mxu0 %v175
    %v280 = vpop.f32.mrf.mxu0
    %v281 = vadd.f32 %v196, %v280
    %v282 = vpop.f32.mrf.mxu0
    %v283 = vadd.f32 %v196, %v282
    %284 = vmatmul.bf16.gmra.mxu0 %v176
    %v285 = vpop.f32.mrf.mxu0
    %v286 = vadd.f32 %v196, %v285
    %v287 = vpop.f32.mrf.mxu0
    %v288 = vadd.f32 %v196, %v287
    %289 = vmatmul.bf16.gmra.mxu0 %v177
    %v290 = vpop.f32.mrf.mxu0
    %v291 = vadd.f32 %v196, %v290
    %v292 = vpop.f32.mrf.mxu0
    %v293 = vadd.f32 %v196, %v292
    %294 = vdwg.mxu0
    %v295 = vmax.f32 %v256, 0.0
    %v296 = vmax.f32 %v258, 0.0
    %v297 = vmax.f32 %v261, 0.0
    %v298 = vmax.f32 %v263, 0.0
    %v299 = vmax.f32 %v266, 0.0
    %v300 = vmax.f32 %v268, 0.0
    %v301 = vmax.f32 %v271, 0.0
    %v302 = vmax.f32 %v273, 0.0
    %v303 = vmax.f32 %v276, 0.0
    %v304 = vmax.f32 %v278, 0.0
    %v305 = vmax.f32 %v281, 0.0
    %v306 = vmax.f32 %v283, 0.0
    %v307 = vmax.f32 %v286, 0.0
    %v308 = vmax.f32 %v288, 0.0
    %v309 = vmax.f32 %v291, 0.0
    %v310 = vmax.f32 %v293, 0.0
    %v311 = vmax.f32 %v295, %v297
    %v312 = vmax.f32 %v296, %v298
    %v313 = vmax.f32 %v299, %v301
    %v314 = vmax.f32 %v300, %v302
    %v315 = vmax.f32 %v303, %v305
    %v316 = vmax.f32 %v304, %v306
    %v317 = vmax.f32 %v307, %v309
    %v318 = vmax.f32 %v308, %v310
    %v319 = vmax.f32 %v311, %v313
    %v320 = vmax.f32 %v312, %v314
    %v321 = vmax.f32 %v315, %v317
    %v322 = vmax.f32 %v316, %v318
    %v323 = vmax.f32 %v319, %v321
    %v324 = vmax.f32 %v320, %v322
    %325 = vst [vmem:[#allocation2] sm:$0xff] %v323
    %326 = vst [vmem:[#allocation2 + $0x8] sm:$0xff] %v324
    // Predicated region
    $region18: #{tpu_custom_call.1} parent=1 // pred_check
      _
    $region19: #{tpu_custom_call.1} parent=1 // pred_check_branch
      %328 = sbr.rel (0) target = $region21
    $region20: #{tpu_custom_call.1} parent=1 // pred_region
      %330 = vsyncadd [#allocation3], 0
      %s331 = sshll.u32 [#allocation2], 4
      %s332 = int_to_ptr.vmem [resolvable:$true] %s331
      %s333 = sshll.u32 %s4, 4
      %s334 = int_to_ptr.hbm [resolvable:$true] %s333
      %339 = dma.vmem_to_hbm [thread:$0]  %s332, 256, %s334, [#allocation3], 128, 128, 8
    $region21: #{tpu_custom_call.1} parent=1 // pred_fallthru
      _
    // Predicated region
    $region22: #{tpu_custom_call.1} parent=1 // pred_check
      _
    $region23: #{tpu_custom_call.1} parent=1 // pred_check_branch
      %341 = sbr.rel (0) target = $region25
    $region24: #{tpu_custom_call.1} parent=1 // pred_region
      %343 = dma.done [#allocation3], 256
    $region25: #{tpu_custom_call.1} parent=1 // pred_fallthru
      _
    %344 = vsyncpa [#allocation3], 1

</llo_original>
